<compile_context>
chip_gen: v6e
topology: v6e:2x2x1
jax: 0.10.0
libtpu: 0.0.40
codegen_flags: <defaults>
</compile_context>

<pallas_src>
import math
import functools

import jax
import jax.numpy as jnp
from jax.experimental import pallas as pl
from jax.experimental.pallas import tpu as pltpu


# ----------------------------------------------------------------------------
# Kernel
# ----------------------------------------------------------------------------

def _gelu_tanh(x):
    # PyTorch F.gelu(x, approximate='tanh'), computed in f32.
    c = math.sqrt(2.0 / math.pi)
    return 0.5 * x * (1.0 + jnp.tanh(c * (x + 0.044715 * x * x * x)))


def _gemma_mlp_kernel(x_ref, wgu_ref, wd_ref, o_ref, acc_ref):
    # x_ref:   (tm, H)        token tile (resident across the j loop)
    # wgu_ref: (H, 2*tn)      interleaved [gate_j | up_j] weight slab for this j
    # wd_ref:  (tn, H)        down_proj weight slab for this j
    # o_ref:   (tm, H)        output tile (resident across the j loop)
    # acc_ref: (tm, H) f32    accumulator scratch
    j = pl.program_id(1)

    @pl.when(j == 0)
    def _():
        acc_ref[...] = jnp.zeros_like(acc_ref)

    x = x_ref[...]  # native dtype (e.g. bf16) straight to the MXU
    # Single fused MXU run for gate and up projections.
    gu = jnp.dot(x, wgu_ref[...], preferred_element_type=jnp.float32)  # (tm, 2*tn)
    tn = gu.shape[1] // 2
    gate = gu[:, :tn]
    up = gu[:, tn:]
    h = (_gelu_tanh(gate) * up).astype(x.dtype)
    acc_ref[...] += jnp.dot(h, wd_ref[...], preferred_element_type=jnp.float32)

    @pl.when(j == pl.num_programs(1) - 1)
    def _():
        o_ref[...] = acc_ref[...].astype(o_ref.dtype)


# ----------------------------------------------------------------------------
# Generation-aware tile selection
# ----------------------------------------------------------------------------

def _round_up(x, m):
    return ((x + m - 1) // m) * m


def _vmem_capacity_bytes():
    try:
        info = pltpu.get_tpu_info()
        v = getattr(info, "vmem_capacity_bytes", None)
        if v:
            return int(v)
    except Exception:
        pass
    # Conservative fallback: assume the smallest per-core VMEM (v7x, 64 MiB).
    return 64 << 20


def _largest_divisor_leq(n, cap):
    cap = max(1, min(cap, n))
    for d in range(cap, 0, -1):
        if n % d == 0:
            return d
    return 1


def _pick_tiles(T, I, tm, tn):
    vmem = _vmem_capacity_bytes()
    big_vmem = vmem >= (100 << 20)
    if big_vmem:
        # v5e / v6e: 128 MiB VMEM.  tm >= 576 flips v6e to MXU-bound.
        tm_target, tn_target, vmem_limit = 640, 1024, (100 << 20)
    else:
        # v7x: 64 MiB / TC.  Smaller tn keeps double-buffered slabs + internal
        # scratch under ~40 MiB while tm=512 stays above the ~310 flop/byte
        # roofline.
        tm_target, tn_target, vmem_limit = 512, 512, (56 << 20)
    vmem_limit = min(vmem_limit, vmem)

    # tn must divide I exactly (weight-axis tiling).
    tn = _largest_divisor_leq(I, tn_target if tn is None else tn)

    # tm only needs to be a multiple of 8; the token axis is zero-padded to a
    # multiple of tm in the wrapper.
    if tm is None:
        tm = min(tm_target, _round_up(T, 8))
        if (not big_vmem) and T > 256 and _round_up(T, tm) // tm < 2:
            # v7x megacore: make sure the "parallel" token axis has >= 2 tiles
            # so both TensorCores get work.
            tm = _round_up(-(-T // 2), 128)
    else:
        tm = _round_up(min(tm, _round_up(T, 8)), 8)

    return tm, tn, vmem_limit


# ----------------------------------------------------------------------------
# Wrapper
# ----------------------------------------------------------------------------

@functools.partial(jax.jit, static_argnames=("tm", "tn", "vmem_limit"))
def _gemma_mlp_call(x, w_gate, w_up, w_down, *, tm, tn, vmem_limit):
    B, S, H = x.shape
    I = w_gate.shape[1]
    T = B * S
    nj = I // tn

    # Pack gate/up as one [H, 2*I] array with per-j interleaved column blocks:
    # columns [j*2tn : j*2tn+tn] = gate block j, [j*2tn+tn : (j+1)*2tn] = up
    # block j.  (In production this packing would be done once at load time.)
    w_gu = jnp.concatenate(
        [w_gate.reshape(H, nj, tn), w_up.reshape(H, nj, tn)], axis=2
    ).reshape(H, nj * 2 * tn)

    # Pad the token axis to a multiple of tm (zero rows produce zero outputs).
    T_pad = _round_up(T, tm)
    x2d = x.reshape(T, H)
    if T_pad != T:
        x2d = jnp.pad(x2d, ((0, T_pad - T), (0, 0)))

    out2d = pl.pallas_call(
        _gemma_mlp_kernel,
        out_shape=jax.ShapeDtypeStruct((T_pad, H), x.dtype),
        grid_spec=pltpu.PrefetchScalarGridSpec(
            num_scalar_prefetch=0,
            grid=(T_pad // tm, nj),
            in_specs=[
                pl.BlockSpec((tm, H), lambda i, j: (i, 0)),       # x tile
                pl.BlockSpec((H, 2 * tn), lambda i, j: (0, j)),   # [gate|up] slab
                pl.BlockSpec((tn, H), lambda i, j: (j, 0)),       # down slab
            ],
            out_specs=pl.BlockSpec((tm, H), lambda i, j: (i, 0)),
            scratch_shapes=[pltpu.VMEM((tm, H), jnp.float32)],
        ),
        compiler_params=pltpu.CompilerParams(
            dimension_semantics=("parallel", "arbitrary"),
            vmem_limit_bytes=vmem_limit,
        ),
    )(x2d, w_gu, w_down)

    return out2d[:T].reshape(B, S, H)


def gemma_mlp(x, w_gate, w_up, w_down, *, tm=None, tn=None):
    """Fused Gemma MLP forward.

    x:      [B, S, H]
    w_gate: [H, I]   gate_proj.weight.T
    w_up:   [H, I]   up_proj.weight.T
    w_down: [I, H]   down_proj.weight.T
    """
    B, S, H = x.shape
    I = w_gate.shape[1]
    tm_, tn_, vmem_limit = _pick_tiles(B * S, I, tm, tn)
    return _gemma_mlp_call(x, w_gate, w_up, w_down,
                           tm=tm_, tn=tn_, vmem_limit=vmem_limit)


# ----------------------------------------------------------------------------
# Reference + tests
# ----------------------------------------------------------------------------

def _reference(x, w_gate, w_up, w_down):
    # Mirrors kernel semantics: f32 matmul accumulation, intermediate cast
    # back to the activation dtype before down_proj.
    xf = x.astype(jnp.float32)
    g = _gelu_tanh(xf @ w_gate.astype(jnp.float32))
    u = xf @ w_up.astype(jnp.float32)
    h = (g * u).astype(x.dtype).astype(jnp.float32)
    return (h @ w_down.astype(jnp.float32)).astype(x.dtype)


def _run_case(key, B, S, H, I, dtype, tm, tn, atol, rtol):
    kx, kg, ku, kd = jax.random.split(key, 4)
    x = jax.random.normal(kx, (B, S, H), dtype=jnp.float32).astype(dtype)
    w_gate = (jax.random.normal(kg, (H, I), dtype=jnp.float32) * 0.05).astype(dtype)
    w_up = (jax.random.normal(ku, (H, I), dtype=jnp.float32) * 0.05).astype(dtype)
    w_down = (jax.random.normal(kd, (I, H), dtype=jnp.float32) * 0.05).astype(dtype)

    out = gemma_mlp(x, w_gate, w_up, w_down, tm=tm, tn=tn)
    out = jax.block_until_ready(out)
    ref = _reference(x, w_gate, w_up, w_down)

    assert out.shape == (B, S, H)
    assert jnp.allclose(out.astype(jnp.float32), ref.astype(jnp.float32),
                        atol=atol, rtol=rtol), f"mismatch vs reference ({dtype})"


if __name__ == "__main__":
    key = jax.random.PRNGKey(0)
    k1, k2, k3 = jax.random.split(key, 3)

    # 1) Tiny config matching the GemmaMLP module (hidden=32, intermediate=64),
    #    f32, auto-picked (generation-aware) tiles -> single grid step.
    _run_case(k1, B=2, S=8, H=32, I=64, dtype=jnp.float32,
              tm=None, tn=None, atol=1e-5, rtol=1e-5)

    # 2) Larger bf16 case exercising the tiled token axis (2 tiles) and the
    #    intermediate-reduction accumulator (2 steps) via explicit tiles.
    _run_case(k2, B=2, S=64, H=256, I=512, dtype=jnp.bfloat16,
              tm=64, tn=256, atol=2e-2, rtol=2e-2)

    # 3) Ragged token count (not a multiple of tm) to exercise the zero-padded
    #    token axis / tail handling.
    _run_case(k3, B=3, S=5, H=128, I=256, dtype=jnp.float32,
              tm=8, tn=128, atol=1e-5, rtol=1e-5)

    print("KERNEL_OK")
</pallas_src>

<mosaic_0001>
module attributes {stable_mosaic.version = 11 : i64} {
  func.func @_gemma_mlp_kernel(%arg0: i32, %arg1: i32, %arg2: memref<16x32xf32, #tpu.memory_space<vmem>>, %arg3: memref<32x128xf32, #tpu.memory_space<vmem>>, %arg4: memref<64x32xf32, #tpu.memory_space<vmem>>, %arg5: memref<16x32xf32, #tpu.memory_space<vmem>>, %arg6: memref<16x32xf32, #tpu.memory_space<vmem>>) attributes {dimension_semantics = [#tpu.dimension_semantics<parallel>, #tpu.dimension_semantics<arbitrary>], iteration_bounds = array<i64: 1, 1>, scalar_prefetch = 0 : i64, scratch_operands = 1 : i64, tpu.core_type = #tpu.core_type<tc>, window_params = [{transform_indices = @transform_0, window_bounds = array<i64: 16, 32>}, {transform_indices = @transform_1, window_bounds = array<i64: 32, 128>}, {transform_indices = @transform_2, window_bounds = array<i64: 64, 32>}, {transform_indices = @transform_3, window_bounds = array<i64: 16, 32>}]} {
    %c0_i32 = arith.constant 0 : i32
    %0 = arith.cmpi eq, %arg1, %c0_i32 : i32
    %1 = arith.extui %0 : i1 to i32
    %c0_i32_0 = arith.constant 0 : i32
    %2 = arith.cmpi ne, %1, %c0_i32_0 : i32
    scf.if %2 {
      %cst_17 = arith.constant 0.000000e+00 : f32
      %30 = vector.broadcast %cst_17 : f32 to vector<16x32xf32>
      %c0_18 = arith.constant 0 : index
      %c0_19 = arith.constant 0 : index
      %31 = vector.load %arg6[%c0_18, %c0_19] : memref<16x32xf32, #tpu.memory_space<vmem>>, vector<16x32xf32>
      tpu.vector_store %arg6[%c0_18, %c0_19], %30 {strides = array<i32>} : memref<16x32xf32, #tpu.memory_space<vmem>>, vector<16x32xf32>,
    } else {
    }
    %c0 = arith.constant 0 : index
    %c0_1 = arith.constant 0 : index
    %3 = vector.load %arg2[%c0, %c0_1] : memref<16x32xf32, #tpu.memory_space<vmem>>, vector<16x32xf32>
    %c0_2 = arith.constant 0 : index
    %c0_3 = arith.constant 0 : index
    %4 = vector.load %arg3[%c0_2, %c0_3] : memref<32x128xf32, #tpu.memory_space<vmem>>, vector<32x128xf32>
    %cst = arith.constant dense<0.000000e+00> : vector<16x128xf32>
    %5 = tpu.matmul %3, %4, %cst {dimension_numbers = #tpu.dot_dimension_numbers<[1], [0], [0], [1], [0, 0, 1, 1], [], []>} : vector<16x32xf32>, vector<32x128xf32>, vector<16x128xf32> -> vector<16x128xf32>
    %6 = vector.extract_strided_slice %5 {offsets = [0, 0], sizes = [16, 64], strides = [1, 1]} : vector<16x128xf32> to vector<16x64xf32>
    %7 = vector.extract_strided_slice %5 {offsets = [0, 64], sizes = [16, 64], strides = [1, 1]} : vector<16x128xf32> to vector<16x64xf32>
    %cst_4 = arith.constant 5.000000e-01 : f32
    %8 = vector.broadcast %cst_4 : f32 to vector<16x64xf32>
    %9 = arith.mulf %8, %6 : vector<16x64xf32>
    %cst_5 = arith.constant 4.471500e-02 : f32
    %10 = vector.broadcast %cst_5 : f32 to vector<16x64xf32>
    %11 = arith.mulf %10, %6 : vector<16x64xf32>
    %12 = arith.mulf %11, %6 : vector<16x64xf32>
    %13 = arith.mulf %12, %6 : vector<16x64xf32>
    %14 = arith.addf %6, %13 : vector<16x64xf32>
    %cst_6 = arith.constant 0.797884583 : f32
    %15 = vector.broadcast %cst_6 : f32 to vector<16x64xf32>
    %16 = arith.mulf %15, %14 : vector<16x64xf32>
    %17 = math.tanh %16 : vector<16x64xf32>
    %cst_7 = arith.constant 1.000000e+00 : f32
    %18 = vector.broadcast %cst_7 : f32 to vector<16x64xf32>
    %19 = arith.addf %18, %17 : vector<16x64xf32>
    %20 = arith.mulf %9, %19 : vector<16x64xf32>
    %21 = arith.mulf %20, %7 : vector<16x64xf32>
    %c0_8 = arith.constant 0 : index
    %c0_9 = arith.constant 0 : index
    %22 = vector.load %arg6[%c0_8, %c0_9] : memref<16x32xf32, #tpu.memory_space<vmem>>, vector<16x32xf32>
    %c0_10 = arith.constant 0 : index
    %c0_11 = arith.constant 0 : index
    %23 = vector.load %arg4[%c0_10, %c0_11] : memref<64x32xf32, #tpu.memory_space<vmem>>, vector<64x32xf32>
    %cst_12 = arith.constant dense<0.000000e+00> : vector<16x32xf32>
    %24 = tpu.matmul %21, %23, %cst_12 {dimension_numbers = #tpu.dot_dimension_numbers<[1], [0], [0], [1], [0, 0, 1, 1], [], []>} : vector<16x64xf32>, vector<64x32xf32>, vector<16x32xf32> -> vector<16x32xf32>
    %25 = arith.addf %22, %24 : vector<16x32xf32>
    %c0_13 = arith.constant 0 : index
    %c0_14 = arith.constant 0 : index
    %26 = vector.load %arg6[%c0_13, %c0_14] : memref<16x32xf32, #tpu.memory_space<vmem>>, vector<16x32xf32>
    tpu.vector_store %arg6[%c0_13, %c0_14], %25 {strides = array<i32>} : memref<16x32xf32, #tpu.memory_space<vmem>>, vector<16x32xf32>,
    %c0_i32_15 = arith.constant 0 : i32
    %27 = arith.cmpi eq, %arg1, %c0_i32_15 : i32
    %28 = arith.extui %27 : i1 to i32
    %c0_i32_16 = arith.constant 0 : i32
    %29 = arith.cmpi ne, %28, %c0_i32_16 : i32
    scf.if %29 {
      %c0_17 = arith.constant 0 : index
      %c0_18 = arith.constant 0 : index
      %30 = vector.load %arg6[%c0_17, %c0_18] : memref<16x32xf32, #tpu.memory_space<vmem>>, vector<16x32xf32>
      %c0_19 = arith.constant 0 : index
      %c0_20 = arith.constant 0 : index
      %31 = vector.load %arg5[%c0_19, %c0_20] : memref<16x32xf32, #tpu.memory_space<vmem>>, vector<16x32xf32>
      tpu.vector_store %arg5[%c0_19, %c0_20], %30 {strides = array<i32>} : memref<16x32xf32, #tpu.memory_space<vmem>>, vector<16x32xf32>,
    } else {
    }
    return
  }
  func.func @transform_0(%arg0: i32, %arg1: i32) -> (i32, i32) {
    %c0_i32 = arith.constant 0 : i32
    %c0_i32_0 = arith.constant 0 : i32
    return %arg0, %c0_i32 : i32, i32
  }
  func.func @transform_1(%arg0: i32, %arg1: i32) -> (i32, i32) {
    %c0_i32 = arith.constant 0 : i32
    %c0_i32_0 = arith.constant 0 : i32
    return %c0_i32, %arg1 : i32, i32
  }
  func.func @transform_2(%arg0: i32, %arg1: i32) -> (i32, i32) {
    %c0_i32 = arith.constant 0 : i32
    %c0_i32_0 = arith.constant 0 : i32
    return %arg1, %c0_i32 : i32, i32
  }
  func.func @transform_3(%arg0: i32, %arg1: i32) -> (i32, i32) {
    %c0_i32 = arith.constant 0 : i32
    %c0_i32_0 = arith.constant 0 : i32
    return %arg0, %c0_i32 : i32, i32
  }
}

</mosaic_0001>

<llo_original>
// kernel: _gemma_mlp_call.1
$region0: #{_gemma_mlp_call.1}
  #allocation0 [shape = 'u32[]', space=smem, size = 0x4, offset = 0x4, fixed_abs, tag = 'smem constant byte address 0x4 - core index']
  #allocation1 [shape = 'u32[144,128]{1,0:T(1,128)}', space=vmem, size = 0x12000, scoped, tag = 'internal scratch']
  #allocation2 [shape = 'f32[16,32]{1,0:T(8,128)}', space=vmem, size = 0x2000, scoped, tag = 'scratch operand']
  %s0 = inlined_call_operand.vmem [shape: f32[16,32], index: 0, kind: input, shape index: {}]
  %s1 = inlined_call_operand.vmem [shape: f32[32,128], index: 1, kind: input, shape index: {}]
  %s2 = inlined_call_operand.vmem [shape: f32[64,32], index: 2, kind: input, shape index: {}]
  %s3 = inlined_call_operand.hbm [shape: f32[16,32], index: 3, kind: output, shape index: {}]
  %s4 = sld [smem:[#allocation0]]
  $region30: #{_gemma_mlp_call.1} parent=0
    _
  %s6 = ssub.s32 1, %s4
  %s7 = scalar_select 0, %s6, %s4
  $region1: #{_gemma_mlp_call.1} parent=0
    #allocation3 [shape = 'u8[8192]{0}', space=vmem, size = 0x2000, scoped, tag = 'output window, operand 0, single buffered']
    #allocation4 [shape = 's32[1]{0}', space=sflag, size = 0x4, scoped, tag = 'scoped memory for _gemma_mlp_call.1']
    %8 = vsyncpa [#allocation4], 0
    // Predicated region
    $region2: #{_gemma_mlp_call.1} parent=1 // pred_check
      _
    $region3: #{_gemma_mlp_call.1} parent=1 // pred_check_branch
      %10 = sbr.rel (0) target = $region5
    $region4: #{_gemma_mlp_call.1} parent=1 // pred_region
      _
    $region5: #{_gemma_mlp_call.1} parent=1 // pred_fallthru
      _
    // Predicated region
    $region6: #{_gemma_mlp_call.1} parent=1 // pred_check
      _
    $region7: #{_gemma_mlp_call.1} parent=1 // pred_check_branch
      %12 = sbr.rel (0) target = $region9
    $region8: #{_gemma_mlp_call.1} parent=1 // pred_region
      _
    $region9: #{_gemma_mlp_call.1} parent=1 // pred_fallthru
      _
    // Predicated region
    $region10: #{_gemma_mlp_call.1} parent=1 // pred_check
      _
    $region11: #{_gemma_mlp_call.1} parent=1 // pred_check_branch
      %14 = sbr.rel (0) target = $region13
    $region12: #{_gemma_mlp_call.1} parent=1 // pred_region
      _
    $region13: #{_gemma_mlp_call.1} parent=1 // pred_fallthru
      _
    %p15 = scmp.eq.s32.totalorder 0, 0
    // Predicated region
    $region14: #{_gemma_mlp_call.1} parent=1 // pred_check
      %p16 = pneg %p15
    $region15: #{_gemma_mlp_call.1} parent=1 // pred_check_branch
      %18 = sbr.rel (%p16) target = $region17
    $region16: #{_gemma_mlp_call.1} parent=1 // pred_region
      %vm19 = vcmask 261120
      %20 = vst.msk [vmem:[#allocation2] sm:$0xff] %vm19, 0.0
      %21 = vst.msk [vmem:[#allocation2 + $0x8] sm:$0xff] %vm19, 0.0
    $region17: #{_gemma_mlp_call.1} parent=1 // pred_fallthru
      _
    %v22 = vld [vmem:[%s0] sm:$0xff]
    %v23 = vld [vmem:[%s0 + $0x8] sm:$0xff]
    %v24 = vld [vmem:[%s1] sm:$0xff]
    %v25 = vld [vmem:[%s1 + $0x8] sm:$0xff]
    %v26 = vld [vmem:[%s1 + $0x10] sm:$0xff]
    %v27 = vld [vmem:[%s1 + $0x18] sm:$0xff]
    %vm28 = vcmask 261120
    %v30 = vsel %vm28, %v22, 0
    %v33 = vsel %vm28, %v23, 0
    %35 = vmatprep.subr.mxu0 0.0
    %36 = vmatpush1.msra.mxu0 0.0
    %37 = vmatprep.subr.mxu0 0.0
    %38 = vmatpush1.msra.mxu0 0.0
    %39 = vmatprep.subr.mxu0 0.0
    %40 = vmatpush1.msra.mxu0 0.0
    %41 = vmatprep.subr.mxu0 0.0
    %42 = vmatpush1.msra.mxu0 0.0
    %43 = vmatprep.subr.mxu0 0.0
    %44 = vmatpush1.msra.mxu0 0.0
    %45 = vmatprep.subr.mxu0 0.0
    %46 = vmatpush1.msra.mxu0 0.0
    %47 = vmatprep.subr.mxu0 0.0
    %48 = vmatpush1.msra.mxu0 0.0
    %49 = vmatprep.subr.mxu0 0.0
    %50 = vmatpush1.msra.mxu0 0.0
    %51 = vmatprep.subr.mxu0 0.0
    %52 = vmatpush1.msra.mxu0 0.0
    %53 = vmatprep.subr.mxu0 0.0
    %54 = vmatpush1.msra.mxu0 0.0
    %55 = vmatprep.subr.mxu0 0.0
    %56 = vmatpush1.msra.mxu0 0.0
    %57 = vmatprep.subr.mxu0 0.0
    %58 = vmatpush1.msra.mxu0 0.0
    %59 = vmatprep.subr.mxu0 0.0
    %60 = vmatpush1.msra.mxu0 %v27
    %61 = vmatprep.subr.mxu0 0.0
    %62 = vmatpush1.msra.mxu0 %v26
    %63 = vmatprep.subr.mxu0 0.0
    %64 = vmatpush1.msra.mxu0 %v25
    %65 = vmatprep.subr.mxu0 0.0
    %66 = vmatpush1.msra.mxu0 %v24
    %67 = vmatprep.subr.mxu0 0.0
    %68 = vmatpush2.msra.mxu0 0.0
    %69 = vmatprep.subr.mxu0 0.0
    %70 = vmatpush2.msra.mxu0 0.0
    %71 = vmatprep.subr.mxu0 0.0
    %72 = vmatpush2.msra.mxu0 0.0
    %73 = vmatprep.subr.mxu0 0.0
    %74 = vmatpush2.msra.mxu0 0.0
    %75 = vmatprep.subr.mxu0 0.0
    %76 = vmatpush2.msra.mxu0 0.0
    %77 = vmatprep.subr.mxu0 0.0
    %78 = vmatpush2.msra.mxu0 0.0
    %79 = vmatprep.subr.mxu0 0.0
    %80 = vmatpush2.msra.mxu0 0.0
    %81 = vmatprep.subr.mxu0 0.0
    %82 = vmatpush2.msra.mxu0 0.0
    %83 = vmatprep.subr.mxu0 0.0
    %84 = vmatpush2.msra.mxu0 0.0
    %85 = vmatprep.subr.mxu0 0.0
    %86 = vmatpush2.msra.mxu0 0.0
    %87 = vmatprep.subr.mxu0 0.0
    %88 = vmatpush2.msra.mxu0 0.0
    %89 = vmatprep.subr.mxu0 0.0
    %90 = vmatpush2.msra.mxu0 0.0
    %91 = vmatprep.subr.mxu0 0.0
    %92 = vmatpush2.msra.mxu0 0.0
    %93 = vmatprep.subr.mxu0 0.0
    %94 = vmatpush2.msra.mxu0 0.0
    %95 = vmatprep.subr.mxu0 0.0
    %96 = vmatpush2.msra.mxu0 0.0
    %97 = vmatprep.subr.mxu0 0.0
    %98 = vmatpush2.msra.mxu0 0.0
    %99 = vmatprep.mubr.f32.mxu0 0.0
    %100 = vmatmul.mubr.f32.gmra.mxu0 %v30
    %v101 = vpop.f32.mrf.mxu0
    %v102 = vadd.f32 0.0, %v101
    %v103 = vpop.f32.mrf.mxu0
    %104 = vmatprep.mubr.f32.mxu0 0.0
    %105 = vmatmul.mubr.f32.gmra.mxu0 %v33
    %v106 = vpop.f32.mrf.mxu0
    %v107 = vadd.f32 0.0, %v106
    %v108 = vpop.f32.mrf.mxu0
    %109 = vdwg.mxu0
    %v110 = vmul.f32 %v102, 0.5
    %v111 = vmul.f32 %v107, 0.5
    %v112 = vmul.f32 %v102, 0.044715
    %v113 = vmul.f32 %v107, 0.044715
    %v114 = vmul.f32 %v112, %v102
    %v115 = vmul.f32 %v113, %v107
    %v116 = vmul.f32 %v114, %v102
    %v117 = vmul.f32 %v115, %v107
    %v118 = vadd.f32 %v102, %v116
    %v119 = vadd.f32 %v107, %v117
    %v120 = vmul.f32 %v118, 0.7978846
    %v121 = vmul.f32 %v119, 0.7978846
    %v122 = vtanh.pop %v120
    %v123 = vtanh.pop %v121
    %v124 = vadd.f32 %v122, 1.0
    %v125 = vadd.f32 %v123, 1.0
    %v126 = vmul.f32 %v110, %v124
    %v127 = vmul.f32 %v111, %v125
    %130 = vrot.lane.b32.xlu0 %v102, 64
    %v131 = vpop.permute.xlu0 %130
    %132 = vrot.lane.b32.xlu0 %v107, 64
    %v133 = vpop.permute.xlu0 %132
    %v136 = vmul.f32 %v126, %v131
    %v137 = vmul.f32 %v127, %v133
    %v138 = vld [vmem:[#allocation2] sm:$0xff]
    %v139 = vld [vmem:[#allocation2 + $0x8] sm:$0xff]
    %v140 = vld [vmem:[%s2] sm:$0xff]
    %v141 = vld [vmem:[%s2 + $0x8] sm:$0xff]
    %v142 = vld [vmem:[%s2 + $0x10] sm:$0xff]
    %v143 = vld [vmem:[%s2 + $0x18] sm:$0xff]
    %v144 = vld [vmem:[%s2 + $0x20] sm:$0xff]
    %v145 = vld [vmem:[%s2 + $0x28] sm:$0xff]
    %v146 = vld [vmem:[%s2 + $0x30] sm:$0xff]
    %v147 = vld [vmem:[%s2 + $0x38] sm:$0xff]
    %vm148 = vcmask 523264
    %v150 = vsel %vm148, %v136, 0
    %v153 = vsel %vm148, %v137, 0
    %155 = vmatprep.subr.mxu0 0.0
    %156 = vmatpush1.msra.mxu0 0.0
    %157 = vmatprep.subr.mxu0 0.0
    %158 = vmatpush1.msra.mxu0 0.0
    %159 = vmatprep.subr.mxu0 0.0
    %160 = vmatpush1.msra.mxu0 0.0
    %161 = vmatprep.subr.mxu0 0.0
    %162 = vmatpush1.msra.mxu0 0.0
    %163 = vmatprep.subr.mxu0 0.0
    %164 = vmatpush1.msra.mxu0 0.0
    %165 = vmatprep.subr.mxu0 0.0
    %166 = vmatpush1.msra.mxu0 0.0
    %167 = vmatprep.subr.mxu0 0.0
    %168 = vmatpush1.msra.mxu0 0.0
    %169 = vmatprep.subr.mxu0 0.0
    %170 = vmatpush1.msra.mxu0 0.0
    %171 = vmatprep.subr.mxu0 0.0
    %172 = vmatpush1.msra.mxu0 %v147
    %173 = vmatprep.subr.mxu0 0.0
    %174 = vmatpush1.msra.mxu0 %v146
    %175 = vmatprep.subr.mxu0 0.0
    %176 = vmatpush1.msra.mxu0 %v145
    %177 = vmatprep.subr.mxu0 0.0
    %178 = vmatpush1.msra.mxu0 %v144
    %179 = vmatprep.subr.mxu0 0.0
    %180 = vmatpush1.msra.mxu0 %v143
    %181 = vmatprep.subr.mxu0 0.0
    %182 = vmatpush1.msra.mxu0 %v142
    %183 = vmatprep.subr.mxu0 0.0
    %184 = vmatpush1.msra.mxu0 %v141
    %185 = vmatprep.subr.mxu0 0.0
    %186 = vmatpush1.msra.mxu0 %v140
    %187 = vmatprep.subr.mxu0 0.0
    %188 = vmatpush2.msra.mxu0 0.0
    %189 = vmatprep.subr.mxu0 0.0
    %190 = vmatpush2.msra.mxu0 0.0
    %191 = vmatprep.subr.mxu0 0.0
    %192 = vmatpush2.msra.mxu0 0.0
    %193 = vmatprep.subr.mxu0 0.0
    %194 = vmatpush2.msra.mxu0 0.0
    %195 = vmatprep.subr.mxu0 0.0
    %196 = vmatpush2.msra.mxu0 0.0
    %197 = vmatprep.subr.mxu0 0.0
    %198 = vmatpush2.msra.mxu0 0.0
    %199 = vmatprep.subr.mxu0 0.0
    %200 = vmatpush2.msra.mxu0 0.0
    %201 = vmatprep.subr.mxu0 0.0
    %202 = vmatpush2.msra.mxu0 0.0
    %203 = vmatprep.subr.mxu0 0.0
    %204 = vmatpush2.msra.mxu0 0.0
    %205 = vmatprep.subr.mxu0 0.0
    %206 = vmatpush2.msra.mxu0 0.0
    %207 = vmatprep.subr.mxu0 0.0
    %208 = vmatpush2.msra.mxu0 0.0
    %209 = vmatprep.subr.mxu0 0.0
    %210 = vmatpush2.msra.mxu0 0.0
    %211 = vmatprep.subr.mxu0 0.0
    %212 = vmatpush2.msra.mxu0 0.0
    %213 = vmatprep.subr.mxu0 0.0
    %214 = vmatpush2.msra.mxu0 0.0
    %215 = vmatprep.subr.mxu0 0.0
    %216 = vmatpush2.msra.mxu0 0.0
    %217 = vmatprep.subr.mxu0 0.0
    %218 = vmatpush2.msra.mxu0 0.0
    %219 = vmatprep.mubr.f32.mxu0 0.0
    %220 = vmatmul.mubr.f32.gmra.mxu0 %v150
    %v221 = vpop.f32.mrf.mxu0
    %v222 = vadd.f32 0.0, %v221
    %v223 = vpop.f32.mrf.mxu0
    %224 = vmatprep.mubr.f32.mxu0 0.0
    %225 = vmatmul.mubr.f32.gmra.mxu0 %v153
    %v226 = vpop.f32.mrf.mxu0
    %v227 = vadd.f32 0.0, %v226
    %v228 = vpop.f32.mrf.mxu0
    %229 = vdwg.mxu0
    %v230 = vadd.f32 %v138, %v222
    %v231 = vadd.f32 %v139, %v227
    %232 = vst.msk [vmem:[#allocation2] sm:$0xff] %vm28, %v230
    %233 = vst.msk [vmem:[#allocation2 + $0x8] sm:$0xff] %vm28, %v231
    // Predicated region
    $region18: #{_gemma_mlp_call.1} parent=1 // pred_check
      %p234 = pneg %p15
    $region19: #{_gemma_mlp_call.1} parent=1 // pred_check_branch
      %236 = sbr.rel (%p234) target = $region21
    $region20: #{_gemma_mlp_call.1} parent=1 // pred_region
      %v237 = vld [vmem:[#allocation2] sm:$0xff]
      %v238 = vld [vmem:[#allocation2 + $0x8] sm:$0xff]
      %239 = vst.msk [vmem:[#allocation3] sm:$0xff] %vm28, %v237
      %240 = vst.msk [vmem:[#allocation3 + $0x8] sm:$0xff] %vm28, %v238
    $region21: #{_gemma_mlp_call.1} parent=1 // pred_fallthru
      _
    // Predicated region
    $region22: #{_gemma_mlp_call.1} parent=1 // pred_check
      _
    $region23: #{_gemma_mlp_call.1} parent=1 // pred_check_branch
      %242 = sbr.rel (0) target = $region25
    $region24: #{_gemma_mlp_call.1} parent=1 // pred_region
      %s244 = ssub.s32 256, 256
      %245 = vsyncadd [#allocation4], %s244
      %s246 = sshll.u32 [#allocation3], 4
      %s247 = int_to_ptr.vmem [resolvable:$true] %s246
      %252 = dma.vmem_to_hbm [thread:$0]  %s247, 256, %s3, [#allocation4], 128, 128, 8
    $region25: #{_gemma_mlp_call.1} parent=1 // pred_fallthru
      _
    // Predicated region
    $region26: #{_gemma_mlp_call.1} parent=1 // pred_check
      _
    $region27: #{_gemma_mlp_call.1} parent=1 // pred_check_branch
      %254 = sbr.rel (0) target = $region29
    $region28: #{_gemma_mlp_call.1} parent=1 // pred_region
      %255 = dma.done [#allocation4], 256
    $region29: #{_gemma_mlp_call.1} parent=1 // pred_fallthru
      _
    %256 = vsyncpa [#allocation4], 1

</llo_original>
